<compile_context>
chip_gen: v6e
topology: v6e:2x2x1
jax: 0.10.0
libtpu: 0.0.40
codegen_flags: <defaults>
</compile_context>

<pallas_src>
import jax
import jax.numpy as jnp
from jax.experimental import pallas as pl
from jax.experimental.pallas import tpu as pltpu


DEFAULT_MAX_TK = 1024


# ----------------------------- Pallas kernels ------------------------------ #
def _linear_kernel_acc_bias(x_ref, wt_ref, b_ref, o_ref, acc_ref):
    # 3-D grid (M, N, K): f32 accumulator carried across the K ("arbitrary") axis.
    k = pl.program_id(2)

    @pl.when(k == 0)
    def _():
        acc_ref[...] = jnp.zeros_like(acc_ref)

    acc_ref[...] += jnp.dot(x_ref[...], wt_ref[...],
                            preferred_element_type=jnp.float32)

    @pl.when(k == pl.num_programs(2) - 1)
    def _():
        o_ref[...] = (acc_ref[...] + b_ref[...]).astype(o_ref.dtype)


def _linear_kernel_acc_nobias(x_ref, wt_ref, o_ref, acc_ref):
    k = pl.program_id(2)

    @pl.when(k == 0)
    def _():
        acc_ref[...] = jnp.zeros_like(acc_ref)

    acc_ref[...] += jnp.dot(x_ref[...], wt_ref[...],
                            preferred_element_type=jnp.float32)

    @pl.when(k == pl.num_programs(2) - 1)
    def _():
        o_ref[...] = acc_ref[...].astype(o_ref.dtype)


def _linear_kernel_1k_bias(x_ref, wt_ref, b_ref, o_ref):
    # Single-K-step variant: no accumulator scratch, no RMW traffic.
    o_ref[...] = (jnp.dot(x_ref[...], wt_ref[...],
                          preferred_element_type=jnp.float32)
                  + b_ref[...]).astype(o_ref.dtype)


def _linear_kernel_1k_nobias(x_ref, wt_ref, o_ref):
    o_ref[...] = jnp.dot(x_ref[...], wt_ref[...],
                         preferred_element_type=jnp.float32).astype(o_ref.dtype)


# ------------------------------ tile picking ------------------------------ #
def _round_up(x, m):
    return ((x + m - 1) // m) * m


def _vmem_budget_bytes():
    """Usable VMEM for this kernel, derived from the device with headroom."""
    try:
        cap = int(pltpu.get_tpu_info().vmem_capacity_bytes)
    except Exception:
        cap = 64 << 20  # conservative default (v7x-class: 64 MiB physical)
    # ~48 MiB usable on v7x (64 MiB physical), ~96 MiB on v5e/v6e (128 MiB).
    return (cap * 3) // 4


def _pick_tiles(M, K_pad, N_pad, in_itemsize, out_itemsize, tm, tn, tk, budget):
    assert tm % 8 == 0, "tm must be a multiple of 8"
    assert tn % 128 == 0, "tn must be a multiple of 128"
    # Sublane packing: 8 rows for f32, 16 for bf16, 32 for int8/fp8.
    sub = 8 * max(1, 4 // in_itemsize)

    tm_eff = min(tm, _round_up(M, sub))
    tn_eff = N_pad if N_pad <= tn else tn

    # K tile: full K when it fits, else the largest 128-multiple divisor.
    if K_pad <= tk:
        tk_eff = K_pad
    else:
        tk_eff = K_pad  # last resort: kept whole (correctness over perf)
        for cand in (1024, 512, 256, 128):
            if cand <= tk and K_pad % cand == 0:
                tk_eff = cand
                break

    def ws(tm_, tn_, tk_):
        w = 2 * tm_ * tk_ * in_itemsize        # x double buffer
        w += 2 * tk_ * tn_ * in_itemsize       # W double buffer
        w += 2 * tm_ * tn_ * out_itemsize      # output double buffer
        if K_pad // tk_ > 1:
            w += tm_ * tn_ * 4                 # f32 accumulator scratch
        w += 2 * tn_ * 4                       # bias
        return w

    # Shrink (K tile, then rows, then cols) until the working set fits VMEM.
    while ws(tm_eff, tn_eff, tk_eff) > budget:
        if (tk_eff > 128 and tk_eff % 256 == 0
                and K_pad % (tk_eff // 2) == 0):
            tk_eff //= 2
        elif tm_eff > sub:
            tm_eff = max(sub, _round_up(tm_eff // 2, sub))
        elif tn_eff > 128:
            tn_eff = max(128, ((tn_eff // 2) // 128) * 128)
        else:
            break

    # Keep both TensorCores busy on 2-TC chips: need >= 2 "parallel" steps.
    if (pl.cdiv(M, tm_eff) * pl.cdiv(N_pad, tn_eff) == 1
            and tn_eff >= 256 and tn_eff % 256 == 0):
        tn_eff //= 2

    return tm_eff, tn_eff, tk_eff


# -------------------------- one-time param packing -------------------------- #
def prepare_linear_params(weight, bias=None, compute_dtype=jnp.bfloat16,
                          max_tk=DEFAULT_MAX_TK):
    """One-time (init) packing of the PyTorch-layout weight [N, K]:
      * transpose to [K, N] (no per-call `.T`),
      * cast to the MXU compute dtype (bf16 by default; f32 accumulate in-kernel),
      * zero-pad K to a multiple of 128 when it will be tiled (zeros are inert
        in the contraction),
      * pad small N up to the 128-lane width so output stores are lane-dense.
    Returns (w_t [K_pad, N_pad], bias2d [1, N_pad] f32 or None, n_out)."""
    N, K = weight.shape
    K_pad = K if (K <= max_tk or K % 128 == 0) else _round_up(K, 128)
    N_pad = N if N >= 128 else 128
    w_t = jnp.pad(weight.T.astype(compute_dtype),
                  ((0, K_pad - K), (0, N_pad - N)))
    b2d = None
    if bias is not None:
        b2d = jnp.pad(bias.astype(jnp.float32), (0, N_pad - N)).reshape(1, N_pad)
    return w_t, b2d, N


# ------------------------------ forward pass ------------------------------ #
def linear_forward(x, w_t, bias=None, n_out=None, *,
                   tm=512, tn=1024, tk=DEFAULT_MAX_TK):
    """x: [..., K]; w_t: prepared weight [K_pad, N_pad]; bias: [1, N_pad] f32 or
    None; n_out: true number of output features (<= N_pad)."""
    K_pad, N_pad = w_t.shape
    K = x.shape[-1]
    assert K <= K_pad
    n_out = N_pad if n_out is None else n_out
    assert n_out <= N_pad

    lead_shape = x.shape[:-1]
    M = 1
    for d in lead_shape:
        M *= d

    out_dtype = x.dtype
    # bf16 (the prepared-weight dtype) feeds the MXU; accumulate in f32.
    x2d = x.reshape(M, K).astype(w_t.dtype)
    if K_pad > K:
        x2d = jnp.pad(x2d, ((0, 0), (0, K_pad - K)))  # zeros are inert in the dot

    budget = int(_vmem_budget_bytes())
    in_b = x2d.dtype.itemsize
    out_b = out_dtype.itemsize
    tm_eff, tn_eff, tk_eff = _pick_tiles(M, K_pad, N_pad, in_b, out_b,
                                         tm, tn, tk, budget)

    n_k = K_pad // tk_eff
    grid_m = pl.cdiv(M, tm_eff)
    grid_n = pl.cdiv(N_pad, tn_eff)
    has_bias = bias is not None
    single_k = (n_k == 1)

    # Deep-buffer the weight stream for skinny-M (GEMV/decode-like) calls.
    deep_w = (M <= tm_eff) and (grid_n * n_k >= 3)

    def w_blockspec(index_map):
        if deep_w:
            return pl.BlockSpec((tk_eff, tn_eff), index_map,
                                pipeline_mode=pl.Buffered(3))
        return pl.BlockSpec((tk_eff, tn_eff), index_map)

    if single_k:
        grid = (grid_m, grid_n)
        in_specs = [pl.BlockSpec((tm_eff, tk_eff), lambda i, j: (i, 0)),
                    w_blockspec(lambda i, j: (0, j))]
        if has_bias:
            in_specs.append(pl.BlockSpec((1, tn_eff), lambda i, j: (0, j)))
        out_spec = pl.BlockSpec((tm_eff, tn_eff), lambda i, j: (i, j))
        kernel = _linear_kernel_1k_bias if has_bias else _linear_kernel_1k_nobias
        scratch_shapes = []
        dims = ("parallel", "parallel")
    else:
        grid = (grid_m, grid_n, n_k)
        in_specs = [pl.BlockSpec((tm_eff, tk_eff), lambda i, j, k: (i, k)),
                    w_blockspec(lambda i, j, k: (k, j))]
        if has_bias:
            in_specs.append(pl.BlockSpec((1, tn_eff), lambda i, j, k: (0, j)))
        out_spec = pl.BlockSpec((tm_eff, tn_eff), lambda i, j, k: (i, j))
        kernel = _linear_kernel_acc_bias if has_bias else _linear_kernel_acc_nobias
        scratch_shapes = [pltpu.VMEM((tm_eff, tn_eff), jnp.float32)]
        dims = ("parallel", "parallel", "arbitrary")

    operands = [x2d, w_t] + ([bias] if has_bias else [])

    cost = pl.CostEstimate(
        flops=2 * M * K_pad * N_pad,
        transcendentals=0,
        bytes_accessed=(M * K_pad * in_b) * grid_n         # x re-read per N pass
                       + (K_pad * N_pad * in_b) * grid_m   # W re-read per M pass
                       + M * N_pad * out_b                 # output written once
                       + (N_pad * 4 * grid_m if has_bias else 0),
    )

    out2d = pl.pallas_call(
        kernel,
        out_shape=jax.ShapeDtypeStruct((M, N_pad), out_dtype),
        grid_spec=pltpu.PrefetchScalarGridSpec(
            num_scalar_prefetch=0,
            grid=grid,
            in_specs=in_specs,
            out_specs=out_spec,
            scratch_shapes=scratch_shapes,
        ),
        compiler_params=pltpu.CompilerParams(
            dimension_semantics=dims,
            vmem_limit_bytes=budget,
        ),
        cost_estimate=cost,
    )(*operands)

    if n_out != N_pad:
        out2d = out2d[:, :n_out]
    return out2d.reshape(*lead_shape, n_out)


# -------------------------- deterministic init ---------------------------- #
def kaiming_normal_init(key, shape, fan_in):
    # weight_init(..., mode='kaiming_normal'): sqrt(1/fan_in) * randn(shape)
    return jnp.sqrt(1.0 / fan_in) * jax.random.normal(key, shape, dtype=jnp.float32)


def make_linear_params(key, in_features, out_features, bias=True,
                       init_weight=1.0, init_bias=0.0):
    kw, kb = jax.random.split(key)
    weight = kaiming_normal_init(kw, (out_features, in_features), in_features) * init_weight
    b = (kaiming_normal_init(kb, (out_features,), in_features) * init_bias) if bias else None
    return weight, b


# --------------------------------- main ----------------------------------- #
if __name__ == "__main__":
    key = jax.random.PRNGKey(0)
    k_params, k_x = jax.random.split(key)

    batch, seq, in_features, out_features = 2, 8, 32, 64
    weight, bias = make_linear_params(k_params, in_features, out_features, bias=True)
    x = jax.random.normal(k_x, (batch, seq, in_features), dtype=jnp.float32)

    # One-time packing: [K, N] layout, bf16 for the MXU, K/N padding as needed.
    w_t, b2d, n_out = prepare_linear_params(weight, bias, compute_dtype=jnp.bfloat16)

    out = linear_forward(x, w_t, b2d, n_out)
    out = jax.block_until_ready(out)

    assert out.shape == (batch, seq, out_features)
    assert out.dtype == x.dtype

    # Reference with the kernel's numerics: bf16-rounded operands, f32 accumulate.
    hp = jax.lax.Precision.HIGHEST
    x_bf = x.astype(jnp.bfloat16).astype(jnp.float32)
    w_bf = weight.astype(jnp.bfloat16).astype(jnp.float32)
    ref_bf16 = jnp.einsum("bsk,nk->bsn", x_bf, w_bf, precision=hp) + bias
    assert jnp.allclose(out, ref_bf16, atol=2e-3, rtol=2e-3), \
        float(jnp.max(jnp.abs(out - ref_bf16)))

    # Sanity check vs full-f32 math (bf16 MXU inputs => looser tolerance).
    ref_f32 = jnp.einsum("bsk,nk->bsn", x, weight, precision=hp) + bias
    assert jnp.allclose(out, ref_f32, atol=1e-1, rtol=1e-1), \
        float(jnp.max(jnp.abs(out - ref_f32)))

    print("KERNEL_OK")
</pallas_src>

<mosaic_0001>
module attributes {stable_mosaic.version = 11 : i64} {
  func.func @_linear_kernel_1k_bias(%arg0: i32, %arg1: i32, %arg2: memref<16x32xbf16, #tpu.memory_space<vmem>>, %arg3: memref<32x128xbf16, #tpu.memory_space<vmem>>, %arg4: memref<1x128xf32, #tpu.memory_space<vmem>>, %arg5: memref<16x128xf32, #tpu.memory_space<vmem>>) attributes {dimension_semantics = [#tpu.dimension_semantics<parallel>, #tpu.dimension_semantics<parallel>], iteration_bounds = array<i64: 1, 1>, scalar_prefetch = 0 : i64, scratch_operands = 0 : i64, tpu.core_type = #tpu.core_type<tc>, window_params = [{transform_indices = @transform_0, window_bounds = array<i64: 16, 32>}, {transform_indices = @transform_1, window_bounds = array<i64: 32, 128>}, {transform_indices = @transform_2, window_bounds = array<i64: 1, 128>}, {transform_indices = @transform_3, window_bounds = array<i64: 16, 128>}]} {
    %c0 = arith.constant 0 : index
    %c0_0 = arith.constant 0 : index
    %0 = vector.load %arg2[%c0, %c0_0] : memref<16x32xbf16, #tpu.memory_space<vmem>>, vector<16x32xbf16>
    %c0_1 = arith.constant 0 : index
    %c0_2 = arith.constant 0 : index
    %1 = vector.load %arg3[%c0_1, %c0_2] : memref<32x128xbf16, #tpu.memory_space<vmem>>, vector<32x128xbf16>
    %cst = arith.constant dense<0.000000e+00> : vector<16x128xf32>
    %2 = tpu.matmul %0, %1, %cst {dimension_numbers = #tpu.dot_dimension_numbers<[1], [0], [0], [1], [0, 0, 1, 1], [], []>} : vector<16x32xbf16>, vector<32x128xbf16>, vector<16x128xf32> -> vector<16x128xf32>
    %c0_3 = arith.constant 0 : index
    %c0_4 = arith.constant 0 : index
    %3 = vector.load %arg4[%c0_3, %c0_4] : memref<1x128xf32, #tpu.memory_space<vmem>>, vector<1x128xf32>
    %4 = vector.broadcast %3 : vector<1x128xf32> to vector<16x128xf32>
    %5 = arith.addf %2, %4 : vector<16x128xf32>
    %c0_5 = arith.constant 0 : index
    %c0_6 = arith.constant 0 : index
    %6 = vector.load %arg5[%c0_5, %c0_6] : memref<16x128xf32, #tpu.memory_space<vmem>>, vector<16x128xf32>
    tpu.vector_store %arg5[%c0_5, %c0_6], %5 {strides = array<i32>} : memref<16x128xf32, #tpu.memory_space<vmem>>, vector<16x128xf32>,
    return
  }
  func.func @transform_0(%arg0: i32, %arg1: i32) -> (i32, i32) {
    %c0_i32 = arith.constant 0 : i32
    %c0_i32_0 = arith.constant 0 : i32
    return %arg0, %c0_i32 : i32, i32
  }
  func.func @transform_1(%arg0: i32, %arg1: i32) -> (i32, i32) {
    %c0_i32 = arith.constant 0 : i32
    %c0_i32_0 = arith.constant 0 : i32
    return %c0_i32, %arg1 : i32, i32
  }
  func.func @transform_2(%arg0: i32, %arg1: i32) -> (i32, i32) {
    %c0_i32 = arith.constant 0 : i32
    %c0_i32_0 = arith.constant 0 : i32
    return %c0_i32, %arg1 : i32, i32
  }
  func.func @transform_3(%arg0: i32, %arg1: i32) -> (i32, i32) {
    %c0_i32 = arith.constant 0 : i32
    return %arg0, %arg1 : i32, i32
  }
}

</mosaic_0001>

<llo_original>
// kernel: tpu_custom_call.1
$region0: #{tpu_custom_call.1}
  #allocation0 [shape = 'u32[]', space=smem, size = 0x4, offset = 0x4, fixed_abs, tag = 'smem constant byte address 0x4 - core index']
  #allocation1 [shape = 'u32[144,128]{1,0:T(1,128)}', space=vmem, size = 0x12000, scoped, tag = 'internal scratch']
  %s0 = inlined_call_operand.hbm [shape: bf16[16,32], index: 0, kind: input, shape index: {}]
  %s1 = inlined_call_operand.hbm [shape: bf16[32,128], index: 1, kind: input, shape index: {}]
  %s2 = inlined_call_operand.vmem [shape: f32[1,128], index: 2, kind: input, shape index: {}]
  %s3 = inlined_call_operand.hbm [shape: f32[16,128], index: 3, kind: output, shape index: {}]
  %s4 = sld [smem:[#allocation0]]
  $region30: #{tpu_custom_call.1} parent=0
    _
  %s6 = ssub.s32 1, %s4
  %s7 = scalar_select 0, %s6, %s4
  $region1: #{tpu_custom_call.1} parent=0
    #allocation2 [shape = 'u8[4096]{0}', space=vmem, size = 0x1000, scoped, tag = 'input window, operand 0, single buffered']
    #allocation3 [shape = 's32[1]{0}', space=sflag, size = 0x4, scoped, tag = 'scoped memory for tpu_custom_call.1']
    #allocation4 [shape = 's32[1]{0}', space=sflag, size = 0x4, scoped, tag = 'scoped memory for tpu_custom_call.1']
    #allocation5 [shape = 'u8[8192]{0}', space=vmem, size = 0x2000, scoped, tag = 'input window, operand 1, single buffered']
    #allocation6 [shape = 's32[1]{0}', space=sflag, size = 0x4, scoped, tag = 'scoped memory for tpu_custom_call.1']
    #allocation7 [shape = 'u8[8192]{0}', space=vmem, size = 0x2000, scoped, tag = 'output window, operand 0, single buffered']
    %8 = vsyncpa [#allocation3], 0
    %9 = vsyncpa [#allocation6], 0
    %10 = vsyncpa [#allocation4], 0
    // Predicated region
    $region2: #{tpu_custom_call.1} parent=1 // pred_check
      _
    $region3: #{tpu_custom_call.1} parent=1 // pred_check_branch
      %12 = sbr.rel (0) target = $region5
    $region4: #{tpu_custom_call.1} parent=1 // pred_region
      %s14 = ssub.s32 128, 128
      %15 = vsyncadd [#allocation3], %s14
      %s16 = sshll.u32 [#allocation2], 4
      %s17 = int_to_ptr.vmem [resolvable:$true] %s16
      %22 = dma.hbm_to_vmem [thread:$0]  %s0, 128, %s17, [#allocation3], 64, 64, 4
    $region5: #{tpu_custom_call.1} parent=1 // pred_fallthru
      _
    // Predicated region
    $region6: #{tpu_custom_call.1} parent=1 // pred_check
      _
    $region7: #{tpu_custom_call.1} parent=1 // pred_check_branch
      %24 = sbr.rel (0) target = $region9
    $region8: #{tpu_custom_call.1} parent=1 // pred_region
      %s26 = ssub.s32 256, 256
      %27 = vsyncadd [#allocation6], %s26
      %s28 = sshll.u32 [#allocation5], 4
      %s29 = int_to_ptr.vmem [resolvable:$true] %s28
      %34 = dma.hbm_to_vmem [thread:$0]  %s1, 256, %s29, [#allocation6], 64, 64, 4
    $region9: #{tpu_custom_call.1} parent=1 // pred_fallthru
      _
    // Predicated region
    $region10: #{tpu_custom_call.1} parent=1 // pred_check
      _
    $region11: #{tpu_custom_call.1} parent=1 // pred_check_branch
      %36 = sbr.rel (0) target = $region13
    $region12: #{tpu_custom_call.1} parent=1 // pred_region
      _
    $region13: #{tpu_custom_call.1} parent=1 // pred_fallthru
      _
    // Predicated region
    $region14: #{tpu_custom_call.1} parent=1 // pred_check
      _
    $region15: #{tpu_custom_call.1} parent=1 // pred_check_branch
      %38 = sbr.rel (0) target = $region17
    $region16: #{tpu_custom_call.1} parent=1 // pred_region
      %39 = dma.done [#allocation3], 128
    $region17: #{tpu_custom_call.1} parent=1 // pred_fallthru
      _
    // Predicated region
    $region18: #{tpu_custom_call.1} parent=1 // pred_check
      _
    $region19: #{tpu_custom_call.1} parent=1 // pred_check_branch
      %41 = sbr.rel (0) target = $region21
    $region20: #{tpu_custom_call.1} parent=1 // pred_region
      %42 = dma.done [#allocation6], 256
    $region21: #{tpu_custom_call.1} parent=1 // pred_fallthru
      _
    %v44 = vld [vmem:[#allocation2] sm:$0xf]
    %v45 = vld [vmem:[#allocation2 + $0x4] sm:$0xf]
    %v46 = vld [vmem:[#allocation5] sm:$0xf]
    %v47 = vld [vmem:[#allocation5 + $0x4] sm:$0xf]
    %v48 = vld [vmem:[#allocation5 + $0x8] sm:$0xf]
    %v49 = vld [vmem:[#allocation5 + $0xc] sm:$0xf]
    %v50 = vld [vmem:[%s2] sm:$0x1]
    %v52 = vlaneseq
    %v53 = vshrl.u32 %v52, 7
    %v54 = vsub.s32 0, %v53
    %v55 = vrot.slane %v50, %v54
    %v59 = vunpack.c.l.b16 %v44
    %v60 = vunpack.c.l.b16 %v45
    %v61 = vpack.c.b16 %v60, %v59
    %v66 = vunpack.c.l.b16 %v46
    %v67 = vunpack.c.l.b16 %v47
    %v68 = vunpack.c.l.b16 %v48
    %v69 = vunpack.c.l.b16 %v49
    %v70 = vpack.c.b16 %v67, %v66
    %v71 = vpack.c.b16 %v69, %v68
    %vm74 = vcmask 261120
    %v76 = vsel %vm74, %v61, 0
    %78 = vmatprep.subr.bf16.mxu0 0
    %79 = vmatpush1.bf16.msra.mxu0 0
    %80 = vmatprep.subr.bf16.mxu0 0
    %81 = vmatpush1.bf16.msra.mxu0 0
    %82 = vmatprep.subr.bf16.mxu0 0
    %83 = vmatpush1.bf16.msra.mxu0 0
    %84 = vmatprep.subr.bf16.mxu0 0
    %85 = vmatpush1.bf16.msra.mxu0 0
    %86 = vmatprep.subr.bf16.mxu0 0
    %87 = vmatpush1.bf16.msra.mxu0 0
    %88 = vmatprep.subr.bf16.mxu0 0
    %89 = vmatpush1.bf16.msra.mxu0 0
    %90 = vmatprep.subr.bf16.mxu0 0
    %91 = vmatpush1.bf16.msra.mxu0 %v71
    %92 = vmatprep.subr.bf16.mxu0 0
    %93 = vmatpush1.bf16.msra.mxu0 %v70
    %94 = vmatprep.subr.bf16.mxu0 0
    %95 = vmatpush2.bf16.msra.mxu0 0
    %96 = vmatprep.subr.bf16.mxu0 0
    %97 = vmatpush2.bf16.msra.mxu0 0
    %98 = vmatprep.subr.bf16.mxu0 0
    %99 = vmatpush2.bf16.msra.mxu0 0
    %100 = vmatprep.subr.bf16.mxu0 0
    %101 = vmatpush2.bf16.msra.mxu0 0
    %102 = vmatprep.subr.bf16.mxu0 0
    %103 = vmatpush2.bf16.msra.mxu0 0
    %104 = vmatprep.subr.bf16.mxu0 0
    %105 = vmatpush2.bf16.msra.mxu0 0
    %106 = vmatprep.subr.bf16.mxu0 0
    %107 = vmatpush2.bf16.msra.mxu0 0
    %108 = vmatprep.subr.bf16.mxu0 0
    %109 = vmatpush2.bf16.msra.mxu0 0
    %110 = vmatprep.mubr.bf16.mxu0 0
    %111 = vmatmul.mubr.bf16.gmra.mxu0 %v76
    %v112 = vpop.f32.mrf.mxu0
    %v113 = vadd.f32 %v55, %v112
    %v114 = vpop.f32.mrf.mxu0
    %v115 = vpop.f32.mrf.mxu0
    %v116 = vadd.f32 %v55, %v115
    %v117 = vpop.f32.mrf.mxu0
    %118 = vdwg.mxu0
    %119 = vst [vmem:[#allocation7] sm:$0xff] %v113
    %120 = vst [vmem:[#allocation7 + $0x8] sm:$0xff] %v116
    // Predicated region
    $region22: #{tpu_custom_call.1} parent=1 // pred_check
      _
    $region23: #{tpu_custom_call.1} parent=1 // pred_check_branch
      %122 = sbr.rel (0) target = $region25
    $region24: #{tpu_custom_call.1} parent=1 // pred_region
      %s124 = ssub.s32 256, 256
      %125 = vsyncadd [#allocation4], %s124
      %s126 = sshll.u32 [#allocation7], 4
      %s127 = int_to_ptr.vmem [resolvable:$true] %s126
      %132 = dma.vmem_to_hbm [thread:$0]  %s127, 256, %s3, [#allocation4], 128, 128, 8
    $region25: #{tpu_custom_call.1} parent=1 // pred_fallthru
      _
    // Predicated region
    $region26: #{tpu_custom_call.1} parent=1 // pred_check
      _
    $region27: #{tpu_custom_call.1} parent=1 // pred_check_branch
      %134 = sbr.rel (0) target = $region29
    $region28: #{tpu_custom_call.1} parent=1 // pred_region
      %135 = dma.done [#allocation4], 256
    $region29: #{tpu_custom_call.1} parent=1 // pred_fallthru
      _
    %136 = vsyncpa [#allocation3], 1
    %137 = vsyncpa [#allocation6], 1
    %138 = vsyncpa [#allocation4], 1

</llo_original>
